<compile_context>
chip_gen: v5e
topology: v5e:2x2
jax: 0.10.0
libtpu: 0.0.40
codegen_flags: <defaults>
</compile_context>

<pallas_src>
import jax
import jax.numpy as jnp
from jax.experimental import pallas as pl
from jax.experimental.pallas import tpu as pltpu


def _round_up(n, m):
    return ((n + m - 1) // m) * m


# ---------------------------------------------------------------------------
# One-time layout prep (module construction, NOT the hot path): split the flat
# SWAG subspace into per-parameter blocks, transpose weights to (in, out), and
# stack [mean; cov_0; ...; cov_{R-1}] along the contraction axis so the rank
# combination rides the MXU. Output lanes padded to 128, hidden only to 8.
# ---------------------------------------------------------------------------
def pack_subspace_params(mean, cov_factor, dims, param_dtype=jnp.float32):
    in_dim, hidden, out_dim = dims
    rank = cov_factor.shape[0]

    s_w1, s_b1, s_w2, s_b2 = hidden * in_dim, hidden, out_dim * hidden, out_dim
    o1 = s_w1
    o2 = o1 + s_b1
    o3 = o2 + s_w2
    o4 = o3 + s_b2
    assert mean.shape[0] == o4 and cov_factor.shape[1] == o4

    hp = _round_up(hidden, 8)      # sublane pad only (don't over-pad non-lane dims)
    op = _round_up(out_dim, 128)   # lane-dense, unmasked output store

    # row 0 = mean, rows 1..R = cov_factor rows
    full = jnp.concatenate([mean[None, :], cov_factor], axis=0)           # (R+1, D)

    w1 = full[:, :o1].reshape(rank + 1, hidden, in_dim).transpose(0, 2, 1)   # (R+1, IN, H)
    b1 = full[:, o1:o2]                                                      # (R+1, H)
    w2 = full[:, o2:o3].reshape(rank + 1, out_dim, hidden).transpose(0, 2, 1)  # (R+1, H, OUT)
    b2 = full[:, o3:o4]                                                      # (R+1, OUT)

    w1 = jnp.pad(w1, ((0, 0), (0, 0), (0, hp - hidden)))
    b1 = jnp.pad(b1, ((0, 0), (0, hp - hidden)))
    w2 = jnp.pad(w2, ((0, 0), (0, hp - hidden), (0, op - out_dim)))
    b2 = jnp.pad(b2, ((0, 0), (0, op - out_dim)))

    # Stack along the contraction axis: row r*IN + i  /  r*HP + h.
    w1_aug = w1.reshape((rank + 1) * in_dim, hp)       # ((R+1)*IN, HP)
    w2_aug = w2.reshape((rank + 1) * hp, op)           # ((R+1)*HP, OP)

    return (w1_aug.astype(param_dtype), b1.astype(param_dtype),
            w2_aug.astype(param_dtype), b2.astype(param_dtype))


# ---------------------------------------------------------------------------
# Fused kernel (one batch-row tile per grid step):
#   t_ref    : SMEM (R,)                proj_params
#   x_ref    : VMEM (TB, IN)            batch tile
#   w1a_ref  : VMEM ((R+1)*IN, HP)      stacked [mean; cov] for fc1.weight (resident)
#   b1s_ref  : VMEM (R+1, HP)           stacked fc1.bias
#   w2a_ref  : VMEM ((R+1)*HP, OP)      stacked fc2.weight
#   b2s_ref  : VMEM (R+1, OP)           stacked fc2.bias
#   o_ref    : VMEM (TB, OP)            lane-dense padded output tile
# ---------------------------------------------------------------------------
def projected_mlp_kernel(t_ref, x_ref, w1a_ref, b1s_ref, w2a_ref, b2s_ref, o_ref):
    rank = t_ref.shape[0]
    cdtype = w1a_ref.dtype
    x = x_ref[...].astype(cdtype)

    # ---- layer 1: subspace projection folded into one MXU contraction ----
    # xa @ [W1_mean; W1_cov_0; ...] == x @ (W1_mean + sum_r t_r * W1_cov_r)
    xa_parts = [x]
    b1 = b1s_ref[0:1, :].astype(jnp.float32)
    for r in range(rank):                  # rank is tiny & static -> unrolled
        tr = t_ref[r]                      # scalar from SMEM
        xa_parts.append(tr.astype(cdtype) * x)
        b1 = b1 + tr * b1s_ref[r + 1:r + 2, :].astype(jnp.float32)
    xa = jnp.concatenate(xa_parts, axis=1)                       # (TB, (R+1)*IN)
    h = jnp.dot(xa, w1a_ref[...], preferred_element_type=jnp.float32) + b1
    h = jnp.maximum(h, 0.0)

    # ---- layer 2: same trick on the hidden activations ----
    hc = h.astype(cdtype)
    ha_parts = [hc]
    b2 = b2s_ref[0:1, :].astype(jnp.float32)
    for r in range(rank):
        tr = t_ref[r]
        ha_parts.append(tr.astype(cdtype) * hc)
        b2 = b2 + tr * b2s_ref[r + 1:r + 2, :].astype(jnp.float32)
    ha = jnp.concatenate(ha_parts, axis=1)                       # (TB, (R+1)*HP)
    o = jnp.dot(ha, w2a_ref[...], preferred_element_type=jnp.float32) + b2
    o_ref[...] = o.astype(o_ref.dtype)


def projected_mlp_forward(x, proj_params, packed, out_dim, *, block_b=None):
    """Hot path: one tiled pallas_call over batch-row tiles, then a static slice
    that drops the zero batch/lane padding."""
    w1a, b1s, w2a, b2s = packed
    B, in_dim = x.shape
    op = w2a.shape[1]

    # MXU-friendly M tile: 128 rows when the batch allows it, else a sublane multiple.
    if block_b is None:
        block_b = 128 if B >= 128 else _round_up(max(B, 1), 8)
    b_pad = _round_up(B, block_b)
    if b_pad != B:
        x = jnp.pad(x, ((0, b_pad - B), (0, 0)))
    grid = (pl.cdiv(b_pad, block_b),)

    # VMEM budget: resident stacked weights + double-buffered x/out tiles + headroom,
    # capped at 64 MiB so the same choice is safe on v7x (64 MiB physical VMEM).
    itemsize = jnp.dtype(w1a.dtype).itemsize
    resident = sum(int(a.size) * jnp.dtype(a.dtype).itemsize for a in packed)
    tile_io = 2 * 2 * (block_b * in_dim + block_b * op) * 4
    vmem_limit = int(min(64 * 2**20, max(32 * 2**20, 2 * (resident + tile_io) + (2 << 20))))
    del itemsize

    out_pad = pl.pallas_call(
        projected_mlp_kernel,
        out_shape=jax.ShapeDtypeStruct((b_pad, op), jnp.float32),
        grid=grid,
        in_specs=[
            pl.BlockSpec(memory_space=pltpu.SMEM),                 # proj_params -> SMEM scalars
            pl.BlockSpec((block_b, in_dim), lambda i: (i, 0)),     # x: tiled over batch rows
            pl.BlockSpec(w1a.shape, lambda i: (0, 0)),             # stacked weights: constant
            pl.BlockSpec(b1s.shape, lambda i: (0, 0)),             #   index_map -> fetched once,
            pl.BlockSpec(w2a.shape, lambda i: (0, 0)),             #   VMEM-resident across tiles
            pl.BlockSpec(b2s.shape, lambda i: (0, 0)),
        ],
        out_specs=pl.BlockSpec((block_b, op), lambda i: (i, 0)),
        compiler_params=pltpu.CompilerParams(
            dimension_semantics=("parallel",),                     # split batch tiles across v7x TCs
            vmem_limit_bytes=vmem_limit,
        ),
    )(proj_params, x, w1a, b1s, w2a, b2s)
    return out_pad[:B, :out_dim]


if __name__ == "__main__":
    # Small shapes consistent with the module.
    B, IN, HIDDEN, OUT = 2, 16, 32, 8
    RANK = 4
    D = HIDDEN * IN + HIDDEN + OUT * HIDDEN + OUT   # 552 flattened params

    key = jax.random.PRNGKey(0)
    k_x, k_t, k_cf, k_mean, k_x2 = jax.random.split(key, 5)

    x = jax.random.normal(k_x, (B, IN), dtype=jnp.float32)
    proj_params = jax.random.normal(k_t, (RANK,), dtype=jnp.float32)
    cov_factor = 0.1 * jax.random.normal(k_cf, (RANK, D), dtype=jnp.float32)
    mean = 0.1 * jax.random.normal(k_mean, (D,), dtype=jnp.float32)

    # One-time buffer layout prep (module construction).
    packed = pack_subspace_params(mean, cov_factor, (IN, HIDDEN, OUT))

    # Pure-JAX reference of the full ProjectedModel forward.
    def reference(xx, tt):
        y = mean + cov_factor.T @ tt
        o = 0
        w1 = y[o:o + HIDDEN * IN].reshape(HIDDEN, IN); o += HIDDEN * IN
        b1 = y[o:o + HIDDEN]; o += HIDDEN
        w2 = y[o:o + OUT * HIDDEN].reshape(OUT, HIDDEN); o += OUT * HIDDEN
        b2 = y[o:o + OUT]
        return jnp.maximum(xx @ w1.T + b1, 0.0) @ w2.T + b2

    # 1) Module-scale check (B=2, single padded 8-row tile).
    fwd = jax.jit(lambda xx, tt: projected_mlp_forward(xx, tt, packed, OUT))
    out = jax.block_until_ready(fwd(x, proj_params))
    ref = reference(x, proj_params)
    assert out.shape == (B, OUT)
    assert jnp.allclose(out, ref, atol=1e-4, rtol=1e-4)

    # 2) Multi-tile check exercising the grid / pipelining / 128-row MXU tiles.
    B2 = 384
    x2 = jax.random.normal(k_x2, (B2, IN), dtype=jnp.float32)
    fwd2 = jax.jit(lambda xx, tt: projected_mlp_forward(xx, tt, packed, OUT, block_b=128))
    out2 = jax.block_until_ready(fwd2(x2, proj_params))
    ref2 = reference(x2, proj_params)
    assert out2.shape == (B2, OUT)
    assert jnp.allclose(out2, ref2, atol=1e-4, rtol=1e-4)

    print("KERNEL_OK")
</pallas_src>

<mosaic_0001>
module attributes {stable_mosaic.version = 11 : i64} {
  func.func @projected_mlp_kernel(%arg0: i32, %arg1: memref<4xf32, #tpu.memory_space<smem>>, %arg2: memref<8x16xf32, #tpu.memory_space<vmem>>, %arg3: memref<80x32xf32, #tpu.memory_space<vmem>>, %arg4: memref<5x32xf32, #tpu.memory_space<vmem>>, %arg5: memref<160x128xf32, #tpu.memory_space<vmem>>, %arg6: memref<5x128xf32, #tpu.memory_space<vmem>>, %arg7: memref<8x128xf32, #tpu.memory_space<vmem>>) attributes {dimension_semantics = [#tpu.dimension_semantics<parallel>], iteration_bounds = array<i64: 1>, scalar_prefetch = 0 : i64, scratch_operands = 0 : i64, tpu.core_type = #tpu.core_type<tc>, window_params = [{transform_indices = @transform_0, window_bounds = array<i64: 4>}, {transform_indices = @transform_1, window_bounds = array<i64: 8, 16>}, {pipeline_mode = #tpu.pipeline_mode<synchronous>, transform_indices = @transform_2, window_bounds = array<i64: 80, 32>}, {pipeline_mode = #tpu.pipeline_mode<synchronous>, transform_indices = @transform_3, window_bounds = array<i64: 5, 32>}, {pipeline_mode = #tpu.pipeline_mode<synchronous>, transform_indices = @transform_4, window_bounds = array<i64: 160, 128>}, {pipeline_mode = #tpu.pipeline_mode<synchronous>, transform_indices = @transform_5, window_bounds = array<i64: 5, 128>}, {transform_indices = @transform_6, window_bounds = array<i64: 8, 128>}]} {
    %c0 = arith.constant 0 : index
    %c0_0 = arith.constant 0 : index
    %0 = vector.load %arg2[%c0, %c0_0] : memref<8x16xf32, #tpu.memory_space<vmem>>, vector<8x16xf32>
    %c0_1 = arith.constant 0 : index
    %c0_2 = arith.constant 0 : index
    %1 = vector.load %arg4[%c0_1, %c0_2] : memref<5x32xf32, #tpu.memory_space<vmem>>, vector<1x32xf32>
    %c0_3 = arith.constant 0 : index
    %2 = memref.load %arg1[%c0_3] : memref<4xf32, #tpu.memory_space<smem>>
    %3 = vector.broadcast %2 : f32 to vector<8x16xf32>
    %4 = arith.mulf %3, %0 : vector<8x16xf32>
    %c1 = arith.constant 1 : index
    %c0_4 = arith.constant 0 : index
    %5 = vector.load %arg4[%c1, %c0_4] : memref<5x32xf32, #tpu.memory_space<vmem>>, vector<1x32xf32>
    %6 = vector.broadcast %2 : f32 to vector<1x32xf32>
    %7 = arith.mulf %6, %5 : vector<1x32xf32>
    %8 = arith.addf %1, %7 : vector<1x32xf32>
    %c1_5 = arith.constant 1 : index
    %9 = memref.load %arg1[%c1_5] : memref<4xf32, #tpu.memory_space<smem>>
    %10 = vector.broadcast %9 : f32 to vector<8x16xf32>
    %11 = arith.mulf %10, %0 : vector<8x16xf32>
    %c2 = arith.constant 2 : index
    %c0_6 = arith.constant 0 : index
    %12 = vector.load %arg4[%c2, %c0_6] : memref<5x32xf32, #tpu.memory_space<vmem>>, vector<1x32xf32>
    %13 = vector.broadcast %9 : f32 to vector<1x32xf32>
    %14 = arith.mulf %13, %12 : vector<1x32xf32>
    %15 = arith.addf %8, %14 : vector<1x32xf32>
    %c2_7 = arith.constant 2 : index
    %16 = memref.load %arg1[%c2_7] : memref<4xf32, #tpu.memory_space<smem>>
    %17 = vector.broadcast %16 : f32 to vector<8x16xf32>
    %18 = arith.mulf %17, %0 : vector<8x16xf32>
    %c3 = arith.constant 3 : index
    %c0_8 = arith.constant 0 : index
    %19 = vector.load %arg4[%c3, %c0_8] : memref<5x32xf32, #tpu.memory_space<vmem>>, vector<1x32xf32>
    %20 = vector.broadcast %16 : f32 to vector<1x32xf32>
    %21 = arith.mulf %20, %19 : vector<1x32xf32>
    %22 = arith.addf %15, %21 : vector<1x32xf32>
    %c3_9 = arith.constant 3 : index
    %23 = memref.load %arg1[%c3_9] : memref<4xf32, #tpu.memory_space<smem>>
    %24 = vector.broadcast %23 : f32 to vector<8x16xf32>
    %25 = arith.mulf %24, %0 : vector<8x16xf32>
    %c4 = arith.constant 4 : index
    %c0_10 = arith.constant 0 : index
    %26 = vector.load %arg4[%c4, %c0_10] : memref<5x32xf32, #tpu.memory_space<vmem>>, vector<1x32xf32>
    %27 = vector.broadcast %23 : f32 to vector<1x32xf32>
    %28 = arith.mulf %27, %26 : vector<1x32xf32>
    %29 = arith.addf %22, %28 : vector<1x32xf32>
    %30 = tpu.concatenate %0, %4, %11, %18, %25 in 1 : vector<8x16xf32>, vector<8x16xf32>, vector<8x16xf32>, vector<8x16xf32>, vector<8x16xf32> -> vector<8x80xf32>
    %c0_11 = arith.constant 0 : index
    %c0_12 = arith.constant 0 : index
    %31 = vector.load %arg3[%c0_11, %c0_12] : memref<80x32xf32, #tpu.memory_space<vmem>>, vector<80x32xf32>
    %cst = arith.constant dense<0.000000e+00> : vector<8x32xf32>
    %32 = tpu.matmul %30, %31, %cst {dimension_numbers = #tpu.dot_dimension_numbers<[1], [0], [0], [1], [0, 0, 1, 1], [], []>} : vector<8x80xf32>, vector<80x32xf32>, vector<8x32xf32> -> vector<8x32xf32>
    %33 = vector.broadcast %29 : vector<1x32xf32> to vector<8x32xf32>
    %34 = arith.addf %32, %33 : vector<8x32xf32>
    %cst_13 = arith.constant 0.000000e+00 : f32
    %35 = vector.broadcast %cst_13 : f32 to vector<8x32xf32>
    %36 = arith.maximumf %34, %35 : vector<8x32xf32>
    %c0_14 = arith.constant 0 : index
    %c0_15 = arith.constant 0 : index
    %37 = vector.load %arg6[%c0_14, %c0_15] : memref<5x128xf32, #tpu.memory_space<vmem>>, vector<1x128xf32>
    %c0_16 = arith.constant 0 : index
    %38 = memref.load %arg1[%c0_16] : memref<4xf32, #tpu.memory_space<smem>>
    %39 = vector.broadcast %38 : f32 to vector<8x32xf32>
    %40 = arith.mulf %39, %36 : vector<8x32xf32>
    %c1_17 = arith.constant 1 : index
    %c0_18 = arith.constant 0 : index
    %41 = vector.load %arg6[%c1_17, %c0_18] : memref<5x128xf32, #tpu.memory_space<vmem>>, vector<1x128xf32>
    %42 = vector.broadcast %38 : f32 to vector<1x128xf32>
    %43 = arith.mulf %42, %41 : vector<1x128xf32>
    %44 = arith.addf %37, %43 : vector<1x128xf32>
    %c1_19 = arith.constant 1 : index
    %45 = memref.load %arg1[%c1_19] : memref<4xf32, #tpu.memory_space<smem>>
    %46 = vector.broadcast %45 : f32 to vector<8x32xf32>
    %47 = arith.mulf %46, %36 : vector<8x32xf32>
    %c2_20 = arith.constant 2 : index
    %c0_21 = arith.constant 0 : index
    %48 = vector.load %arg6[%c2_20, %c0_21] : memref<5x128xf32, #tpu.memory_space<vmem>>, vector<1x128xf32>
    %49 = vector.broadcast %45 : f32 to vector<1x128xf32>
    %50 = arith.mulf %49, %48 : vector<1x128xf32>
    %51 = arith.addf %44, %50 : vector<1x128xf32>
    %c2_22 = arith.constant 2 : index
    %52 = memref.load %arg1[%c2_22] : memref<4xf32, #tpu.memory_space<smem>>
    %53 = vector.broadcast %52 : f32 to vector<8x32xf32>
    %54 = arith.mulf %53, %36 : vector<8x32xf32>
    %c3_23 = arith.constant 3 : index
    %c0_24 = arith.constant 0 : index
    %55 = vector.load %arg6[%c3_23, %c0_24] : memref<5x128xf32, #tpu.memory_space<vmem>>, vector<1x128xf32>
    %56 = vector.broadcast %52 : f32 to vector<1x128xf32>
    %57 = arith.mulf %56, %55 : vector<1x128xf32>
    %58 = arith.addf %51, %57 : vector<1x128xf32>
    %c3_25 = arith.constant 3 : index
    %59 = memref.load %arg1[%c3_25] : memref<4xf32, #tpu.memory_space<smem>>
    %60 = vector.broadcast %59 : f32 to vector<8x32xf32>
    %61 = arith.mulf %60, %36 : vector<8x32xf32>
    %c4_26 = arith.constant 4 : index
    %c0_27 = arith.constant 0 : index
    %62 = vector.load %arg6[%c4_26, %c0_27] : memref<5x128xf32, #tpu.memory_space<vmem>>, vector<1x128xf32>
    %63 = vector.broadcast %59 : f32 to vector<1x128xf32>
    %64 = arith.mulf %63, %62 : vector<1x128xf32>
    %65 = arith.addf %58, %64 : vector<1x128xf32>
    %66 = tpu.concatenate %36, %40, %47, %54, %61 in 1 : vector<8x32xf32>, vector<8x32xf32>, vector<8x32xf32>, vector<8x32xf32>, vector<8x32xf32> -> vector<8x160xf32>
    %c0_28 = arith.constant 0 : index
    %c0_29 = arith.constant 0 : index
    %67 = vector.load %arg5[%c0_28, %c0_29] : memref<160x128xf32, #tpu.memory_space<vmem>>, vector<160x128xf32>
    %cst_30 = arith.constant dense<0.000000e+00> : vector<8x128xf32>
    %68 = tpu.matmul %66, %67, %cst_30 {dimension_numbers = #tpu.dot_dimension_numbers<[1], [0], [0], [1], [0, 0, 1, 1], [], []>} : vector<8x160xf32>, vector<160x128xf32>, vector<8x128xf32> -> vector<8x128xf32>
    %69 = vector.broadcast %65 : vector<1x128xf32> to vector<8x128xf32>
    %70 = arith.addf %68, %69 : vector<8x128xf32>
    %c0_31 = arith.constant 0 : index
    %c0_32 = arith.constant 0 : index
    %71 = vector.load %arg7[%c0_31, %c0_32] : memref<8x128xf32, #tpu.memory_space<vmem>>, vector<8x128xf32>
    tpu.vector_store %arg7[%c0_31, %c0_32], %70 {strides = array<i32>} : memref<8x128xf32, #tpu.memory_space<vmem>>, vector<8x128xf32>,
    return
  }
  func.func @transform_0(%arg0: i32) -> i32 {
    %c0_i32 = arith.constant 0 : i32
    %c0_i32_0 = arith.constant 0 : i32
    return %c0_i32 : i32
  }
  func.func @transform_1(%arg0: i32) -> (i32, i32) {
    %c0_i32 = arith.constant 0 : i32
    %c0_i32_0 = arith.constant 0 : i32
    return %arg0, %c0_i32 : i32, i32
  }
  func.func @transform_2(%arg0: i32) -> (i32, i32) {
    %c0_i32 = arith.constant 0 : i32
    %c0_i32_0 = arith.constant 0 : i32
    %c0_i32_1 = arith.constant 0 : i32
    return %c0_i32, %c0_i32_0 : i32, i32
  }
  func.func @transform_3(%arg0: i32) -> (i32, i32) {
    %c0_i32 = arith.constant 0 : i32
    %c0_i32_0 = arith.constant 0 : i32
    %c0_i32_1 = arith.constant 0 : i32
    return %c0_i32, %c0_i32_0 : i32, i32
  }
  func.func @transform_4(%arg0: i32) -> (i32, i32) {
    %c0_i32 = arith.constant 0 : i32
    %c0_i32_0 = arith.constant 0 : i32
    %c0_i32_1 = arith.constant 0 : i32
    return %c0_i32, %c0_i32_0 : i32, i32
  }
  func.func @transform_5(%arg0: i32) -> (i32, i32) {
    %c0_i32 = arith.constant 0 : i32
    %c0_i32_0 = arith.constant 0 : i32
    %c0_i32_1 = arith.constant 0 : i32
    return %c0_i32, %c0_i32_0 : i32, i32
  }
  func.func @transform_6(%arg0: i32) -> (i32, i32) {
    %c0_i32 = arith.constant 0 : i32
    %c0_i32_0 = arith.constant 0 : i32
    return %arg0, %c0_i32 : i32, i32
  }
}

</mosaic_0001>

<llo_original>
// kernel: _lambda_.1
$region0: #{_lambda_.1}
  #allocation0 [shape = 'u32[]', space=smem, size = 0x4, offset = 0x4, fixed_abs, tag = 'smem constant byte address 0x4 - core index']
  #allocation1 [shape = 'u32[72,128]{1,0:T(1,128)}', space=vmem, size = 0x9000, scoped, tag = 'internal scratch']
  %s0 = inlined_call_operand.vmem [shape: f32[4], index: 0, kind: input, shape index: {}]
  %s1 = inlined_call_operand.vmem [shape: f32[8,16], index: 1, kind: input, shape index: {}]
  %s2 = inlined_call_operand.hbm [shape: f32[80,32], index: 2, kind: input, shape index: {}]
  %s3 = inlined_call_operand.hbm [shape: f32[5,32], index: 3, kind: input, shape index: {}]
  %s4 = inlined_call_operand.hbm [shape: f32[160,128], index: 4, kind: input, shape index: {}]
  %s5 = inlined_call_operand.vmem [shape: f32[5,128], index: 5, kind: input, shape index: {}]
  %s6 = inlined_call_operand.vmem [shape: f32[8,128], index: 6, kind: output, shape index: {}]
  %s7 = sld [smem:[#allocation0]]
  $region50: #{_lambda_.1} parent=0
    _
  %s9 = ssub.s32 1, %s7
  %s10 = scalar_select 0, %s9, %s7
  $region1: #{_lambda_.1} parent=0
    #allocation2 [shape = 'u8[512]{0}', space=smem, size = 0x200, scoped, tag = 'input window, operand 0, single buffered']
    #allocation3 [shape = 's32[1]{0}', space=sflag, size = 0x4, scoped, tag = 'scoped memory for _lambda_.1']
    #allocation4 [shape = 's32[1]{0}', space=sflag, size = 0x4, scoped, tag = 'scoped memory for _lambda_.1']
    #allocation5 [shape = 'u8[40960]{0}', space=vmem, size = 0xa000, scoped, tag = 'input window, operand 2, single buffered']
    #allocation6 [shape = 'u8[4096]{0}', space=vmem, size = 0x1000, scoped, tag = 'input window, operand 3, single buffered']
    #allocation7 [shape = 's32[1]{0}', space=sflag, size = 0x4, scoped, tag = 'scoped memory for _lambda_.1']
    #allocation8 [shape = 'u8[81920]{0}', space=vmem, size = 0x14000, scoped, tag = 'input window, operand 4, single buffered']
    %11 = vsyncpa [#allocation4], 0
    %12 = vsyncpa [#allocation3], 0
    %13 = vsyncpa [#allocation7], 0
    // Predicated region
    $region2: #{_lambda_.1} parent=1 // pred_check
      _
    $region3: #{_lambda_.1} parent=1 // pred_check_branch
      %15 = sbr.rel (0) target = $region5
    $region4: #{_lambda_.1} parent=1 // pred_region
      %17 = vsyncadd [#allocation4], 0
      %s19 = sshll.u32 %s0, 4
      %s20 = int_to_ptr.vmem [resolvable:$true] %s19
      %22 = dma.vmem_to_smem %s20, 16, [#allocation2], [#allocation4]
    $region5: #{_lambda_.1} parent=1 // pred_fallthru
      _
    // Predicated region
    $region6: #{_lambda_.1} parent=1 // pred_check
      _
    $region7: #{_lambda_.1} parent=1 // pred_check_branch
      %24 = sbr.rel (0) target = $region9
    $region8: #{_lambda_.1} parent=1 // pred_region
      _
    $region9: #{_lambda_.1} parent=1 // pred_fallthru
      _
    // Predicated region
    $region10: #{_lambda_.1} parent=1 // pred_check
      _
    $region11: #{_lambda_.1} parent=1 // pred_check_branch
      %26 = sbr.rel (0) target = $region13
    $region12: #{_lambda_.1} parent=1 // pred_region
      %28 = vsyncadd [#allocation3], 0
      %s29 = sshll.u32 %s2, 4
      %s30 = int_to_ptr.hbm [resolvable:$true] %s29
      %s31 = sshll.u32 [#allocation5], 4
      %s32 = int_to_ptr.vmem [resolvable:$true] %s31
      %37 = dma.hbm_to_vmem [thread:$0]  %s30, 1280, %s32, [#allocation3], 128, 128, 8
    $region13: #{_lambda_.1} parent=1 // pred_fallthru
      _
    // Predicated region
    $region14: #{_lambda_.1} parent=1 // pred_check
      _
    $region15: #{_lambda_.1} parent=1 // pred_check_branch
      %39 = sbr.rel (0) target = $region17
    $region16: #{_lambda_.1} parent=1 // pred_region
      %41 = vsyncadd [#allocation7], 0
      %s43 = sshll.u32 %s3, 4
      %s44 = int_to_ptr.hbm [resolvable:$true] %s43
      %s45 = sshll.u32 [#allocation6], 4
      %s46 = int_to_ptr.vmem [resolvable:$true] %s45
      %48 = dma.hbm_to_vmem [thread:$0]  %s44, 128, %s46, [#allocation7]
    $region17: #{_lambda_.1} parent=1 // pred_fallthru
      _
    // Predicated region
    $region18: #{_lambda_.1} parent=1 // pred_check
      _
    $region19: #{_lambda_.1} parent=1 // pred_check_branch
      %50 = sbr.rel (0) target = $region21
    $region20: #{_lambda_.1} parent=1 // pred_region
      %52 = vsyncadd [#allocation7], 0
      %s53 = sshll.u32 %s4, 4
      %s54 = int_to_ptr.hbm [resolvable:$true] %s53
      %s55 = sshll.u32 [#allocation8], 4
      %s56 = int_to_ptr.vmem [resolvable:$true] %s55
      %61 = dma.hbm_to_vmem [thread:$0]  %s54, 2560, %s56, [#allocation7], 128, 128, 8
    $region21: #{_lambda_.1} parent=1 // pred_fallthru
      _
    // Predicated region
    $region22: #{_lambda_.1} parent=1 // pred_check
      _
    $region23: #{_lambda_.1} parent=1 // pred_check_branch
      %63 = sbr.rel (0) target = $region25
    $region24: #{_lambda_.1} parent=1 // pred_region
      _
    $region25: #{_lambda_.1} parent=1 // pred_fallthru
      _
    // Predicated region
    $region26: #{_lambda_.1} parent=1 // pred_check
      _
    $region27: #{_lambda_.1} parent=1 // pred_check_branch
      %65 = sbr.rel (0) target = $region29
    $region28: #{_lambda_.1} parent=1 // pred_region
      %67 = dma.done [#allocation4], 16
    $region29: #{_lambda_.1} parent=1 // pred_fallthru
      _
    // Predicated region
    $region30: #{_lambda_.1} parent=1 // pred_check
      _
    $region31: #{_lambda_.1} parent=1 // pred_check_branch
      %69 = sbr.rel (0) target = $region33
    $region32: #{_lambda_.1} parent=1 // pred_region
      %71 = dma.done [#allocation3], 1280
    $region33: #{_lambda_.1} parent=1 // pred_fallthru
      _
    // Predicated region
    $region34: #{_lambda_.1} parent=1 // pred_check
      _
    $region35: #{_lambda_.1} parent=1 // pred_check_branch
      %73 = sbr.rel (0) target = $region37
    $region36: #{_lambda_.1} parent=1 // pred_region
      %75 = dma.done [#allocation7], 128
    $region37: #{_lambda_.1} parent=1 // pred_fallthru
      _
    // Predicated region
    $region38: #{_lambda_.1} parent=1 // pred_check
      _
    $region39: #{_lambda_.1} parent=1 // pred_check_branch
      %77 = sbr.rel (0) target = $region41
    $region40: #{_lambda_.1} parent=1 // pred_region
      %79 = dma.done [#allocation7], 2560
    $region41: #{_lambda_.1} parent=1 // pred_fallthru
      _
    %80 = sfence
    %v81 = vld [vmem:[%s1] sm:$0xff]
    %v82 = vld [vmem:[#allocation6] sm:$0x1]
    %s83 = sld [smem:[#allocation2]]
    %v84 = vstv %s83
    %v85 = vmul.f32 %v84, %v81
    %v86 = vld [vmem:[#allocation6 + $0x1] sm:$0x1]
    %v87 = vmul.f32 %v84, %v86
    %v88 = vadd.f32 %v82, %v87
    %s89 = sld [smem:[#allocation2 + $0x1]]
    %v90 = vstv %s89
    %v91 = vmul.f32 %v90, %v81
    %v92 = vld [vmem:[#allocation6 + $0x2] sm:$0x1]
    %v93 = vmul.f32 %v90, %v92
    %v94 = vadd.f32 %v88, %v93
    %s95 = sld [smem:[#allocation2 + $0x2]]
    %v96 = vstv %s95
    %v97 = vmul.f32 %v96, %v81
    %v98 = vld [vmem:[#allocation6 + $0x3] sm:$0x1]
    %v99 = vmul.f32 %v96, %v98
    %v100 = vadd.f32 %v94, %v99
    %s101 = sld [smem:[#allocation2 + $0x3]]
    %v102 = vstv %s101
    %v103 = vmul.f32 %v102, %v81
    %v104 = vld [vmem:[#allocation6 + $0x4] sm:$0x1]
    %v105 = vmul.f32 %v102, %v104
    %v106 = vadd.f32 %v100, %v105
    %108 = vrot.lane.b32.xlu0 %v85, 16
    %v109 = vpop.permute.xlu0 %108
    %112 = vrot.lane.b32.xlu0 %v91, 32
    %v113 = vpop.permute.xlu0 %112
    %116 = vrot.lane.b32.xlu0 %v97, 48
    %v117 = vpop.permute.xlu0 %116
    %120 = vrot.lane.b32.xlu0 %v103, 64
    %v121 = vpop.permute.xlu0 %120
    %vm123 = vcmask 130048
    %v124 = vsel %vm123, %v81, %v109
    %vm125 = vcmask 261120
    %v126 = vsel %vm125, %v124, %v113
    %vm127 = vcmask 392192
    %v128 = vsel %vm127, %v126, %v117
    %vm129 = vcmask 523264
    %v130 = vsel %vm129, %v128, %v121
    %v131 = vld [vmem:[#allocation5] sm:$0xff]
    %v132 = vld [vmem:[#allocation5 + $0x8] sm:$0xff]
    %v133 = vld [vmem:[#allocation5 + $0x10] sm:$0xff]
    %v134 = vld [vmem:[#allocation5 + $0x18] sm:$0xff]
    %v135 = vld [vmem:[#allocation5 + $0x20] sm:$0xff]
    %v136 = vld [vmem:[#allocation5 + $0x28] sm:$0xff]
    %v137 = vld [vmem:[#allocation5 + $0x30] sm:$0xff]
    %v138 = vld [vmem:[#allocation5 + $0x38] sm:$0xff]
    %v139 = vld [vmem:[#allocation5 + $0x40] sm:$0xff]
    %v140 = vld [vmem:[#allocation5 + $0x48] sm:$0xff]
    %v141 = vperm.slane %v106, 0
    %vm142 = vcmask 654336
    %v144 = vsel %vm142, %v130, 0
    %146 = vmatpush.msra.mxu0 0.0
    %147 = vmatpush.msra.mxu0 0.0
    %148 = vmatpush.msra.mxu0 0.0
    %149 = vmatpush.msra.mxu0 0.0
    %150 = vmatpush.msra.mxu0 0.0
    %151 = vmatpush.msra.mxu0 0.0
    %152 = vmatpush.msra.mxu0 %v140
    %153 = vmatpush.msra.mxu0 %v139
    %154 = vmatpush.msra.mxu0 %v138
    %155 = vmatpush.msra.mxu0 %v137
    %156 = vmatpush.msra.mxu0 %v136
    %157 = vmatpush.msra.mxu0 %v135
    %158 = vmatpush.msra.mxu0 %v134
    %159 = vmatpush.msra.mxu0 %v133
    %160 = vmatpush.msra.mxu0 %v132
    %161 = vmatpush.msra.mxu0 %v131
    %162 = vmatmul.f32.gmra.mxu0 %v144
    %v163 = vpop.f32.mrf.mxu0
    %v164 = vadd.f32 %v141, %v163
    %165 = vdwg.mxu0
    %v166 = vmax.f32 %v164, 0.0
    %v167 = vld [vmem:[%s5] sm:$0x1]
    %v168 = vmul.f32 %v84, %v166
    %v169 = vld [vmem:[%s5 + $0x1] sm:$0x1]
    %v170 = vmul.f32 %v84, %v169
    %v171 = vadd.f32 %v167, %v170
    %v172 = vmul.f32 %v90, %v166
    %v173 = vld [vmem:[%s5 + $0x2] sm:$0x1]
    %v174 = vmul.f32 %v90, %v173
    %v175 = vadd.f32 %v171, %v174
    %v176 = vmul.f32 %v96, %v166
    %v177 = vld [vmem:[%s5 + $0x3] sm:$0x1]
    %v178 = vmul.f32 %v96, %v177
    %v179 = vadd.f32 %v175, %v178
    %v180 = vmul.f32 %v102, %v166
    %v181 = vld [vmem:[%s5 + $0x4] sm:$0x1]
    %v182 = vmul.f32 %v102, %v181
    %v183 = vadd.f32 %v179, %v182
    %185 = vrot.lane.b32.xlu0 %v168, 32
    %v186 = vpop.permute.xlu0 %185
    %189 = vrot.lane.b32.xlu0 %v172, 64
    %v190 = vpop.permute.xlu0 %189
    %193 = vrot.lane.b32.xlu0 %v176, 96
    %v194 = vpop.permute.xlu0 %193
    %v196 = vsel %vm125, %v166, %v186
    %v197 = vsel %vm129, %v196, %v190
    %vm198 = vcmask 785408
    %v199 = vsel %vm198, %v197, %v194
    %v200 = vld [vmem:[#allocation8] sm:$0xff]
    %v201 = vld [vmem:[#allocation8 + $0x8] sm:$0xff]
    %v202 = vld [vmem:[#allocation8 + $0x10] sm:$0xff]
    %v203 = vld [vmem:[#allocation8 + $0x18] sm:$0xff]
    %v204 = vld [vmem:[#allocation8 + $0x20] sm:$0xff]
    %v205 = vld [vmem:[#allocation8 + $0x28] sm:$0xff]
    %v206 = vld [vmem:[#allocation8 + $0x30] sm:$0xff]
    %v207 = vld [vmem:[#allocation8 + $0x38] sm:$0xff]
    %v208 = vld [vmem:[#allocation8 + $0x40] sm:$0xff]
    %v209 = vld [vmem:[#allocation8 + $0x48] sm:$0xff]
    %v210 = vld [vmem:[#allocation8 + $0x50] sm:$0xff]
    %v211 = vld [vmem:[#allocation8 + $0x58] sm:$0xff]
    %v212 = vld [vmem:[#allocation8 + $0x60] sm:$0xff]
    %v213 = vld [vmem:[#allocation8 + $0x68] sm:$0xff]
    %v214 = vld [vmem:[#allocation8 + $0x70] sm:$0xff]
    %v215 = vld [vmem:[#allocation8 + $0x78] sm:$0xff]
    %v216 = vld [vmem:[#allocation8 + $0x80] sm:$0xff]
    %v217 = vld [vmem:[#allocation8 + $0x88] sm:$0xff]
    %v218 = vld [vmem:[#allocation8 + $0x90] sm:$0xff]
    %v219 = vld [vmem:[#allocation8 + $0x98] sm:$0xff]
    %v220 = vperm.slane %v183, 0
    %v222 = vsel %vm125, %v180, 0
    %224 = vmatpush.msra.mxu0 %v215
    %225 = vmatpush.msra.mxu0 %v214
    %226 = vmatpush.msra.mxu0 %v213
    %227 = vmatpush.msra.mxu0 %v212
    %228 = vmatpush.msra.mxu0 %v211
    %229 = vmatpush.msra.mxu0 %v210
    %230 = vmatpush.msra.mxu0 %v209
    %231 = vmatpush.msra.mxu0 %v208
    %232 = vmatpush.msra.mxu0 %v207
    %233 = vmatpush.msra.mxu0 %v206
    %234 = vmatpush.msra.mxu0 %v205
    %235 = vmatpush.msra.mxu0 %v204
    %236 = vmatpush.msra.mxu0 %v203
    %237 = vmatpush.msra.mxu0 %v202
    %238 = vmatpush.msra.mxu0 %v201
    %239 = vmatpush.msra.mxu0 %v200
    %240 = vmatmul.f32.gmra.mxu0 %v199
    %v241 = vpop.f32.mrf.mxu0
    %v242 = vadd.f32 %v220, %v241
    %243 = vdwg.mxu0
    %244 = vmatpush.msra.mxu0 0.0
    %245 = vmatpush.msra.mxu0 0.0
    %246 = vmatpush.msra.mxu0 0.0
    %247 = vmatpush.msra.mxu0 0.0
    %248 = vmatpush.msra.mxu0 0.0
    %249 = vmatpush.msra.mxu0 0.0
    %250 = vmatpush.msra.mxu0 0.0
    %251 = vmatpush.msra.mxu0 0.0
    %252 = vmatpush.msra.mxu0 0.0
    %253 = vmatpush.msra.mxu0 0.0
    %254 = vmatpush.msra.mxu0 0.0
    %255 = vmatpush.msra.mxu0 0.0
    %256 = vmatpush.msra.mxu0 %v219
    %257 = vmatpush.msra.mxu0 %v218
    %258 = vmatpush.msra.mxu0 %v217
    %259 = vmatpush.msra.mxu0 %v216
    %260 = vmatmul.f32.gmra.mxu0 %v222
    %v261 = vpop.f32.mrf.mxu0
    %v262 = vadd.f32 %v242, %v261
    %263 = vdwg.mxu0
    %264 = vst [vmem:[%s6] sm:$0xff] %v262
    // Predicated region
    $region42: #{_lambda_.1} parent=1 // pred_check
      _
    $region43: #{_lambda_.1} parent=1 // pred_check_branch
      %266 = sbr.rel (0) target = $region45
    $region44: #{_lambda_.1} parent=1 // pred_region
      _
    $region45: #{_lambda_.1} parent=1 // pred_fallthru
      _
    // Predicated region
    $region46: #{_lambda_.1} parent=1 // pred_check
      _
    $region47: #{_lambda_.1} parent=1 // pred_check_branch
      %268 = sbr.rel (0) target = $region49
    $region48: #{_lambda_.1} parent=1 // pred_region
      _
    $region49: #{_lambda_.1} parent=1 // pred_fallthru
      _
    %269 = vsyncpa [#allocation3], 1
    %270 = vsyncpa [#allocation7], 1
    %271 = vsyncpa [#allocation4], 1

</llo_original>
